<compile_context>
chip_gen: v7x
topology: tpu7x:2x2x1
jax: 0.10.0
libtpu: 0.0.40
codegen_flags: <defaults>
</compile_context>

<pallas_src>
import functools

import jax
import jax.numpy as jnp
from jax.experimental import pallas as pl
from jax.experimental.pallas import tpu as pltpu


def _round_up(x, m):
    return ((x + m - 1) // m) * m


def _cdiv(a, b):
    return -(-a // b)


def _vmem_capacity_bytes():
    # Generation-aware VMEM budget (128 MiB on v5e/v6e, 64 MiB per TC on v7x).
    # Fall back to the conservative 64 MiB if the query is unavailable.
    try:
        return int(pltpu.get_tpu_info().vmem_capacity_bytes)
    except Exception:
        return 64 * 1024 * 1024


def mlp_kernel(x_ref, w1_ref, b1_ref, w2_ref, b2_ref, o_ref, h_acc):
    """One (tile_n rows, tile_k of Cin) step of the fused MLP.

    Grid = (N tiles, K tiles over Cin).  The hidden pre-activation is
    accumulated in an f32 VMEM scratch across the K axis; on the last K step
    bias + ReLU + second matmul + log-softmax run and the lane-dense output
    tile is stored.  Eval-mode dropout == identity.
    """
    k = pl.program_id(1)

    @pl.when(k == 0)
    def _():
        h_acc[...] = jnp.zeros_like(h_acc)

    # Linear 1 partial product (MXU: bf16 operands, f32 accumulate).
    h_acc[...] += jnp.dot(x_ref[...], w1_ref[...],
                          preferred_element_type=jnp.float32)

    @pl.when(k == pl.num_programs(1) - 1)
    def _():
        # Bias + ReLU in f32 on the VPU.
        h = jnp.maximum(h_acc[...] + b1_ref[...], 0.0)
        # Linear 2 (bf16 operands for the MXU, f32 accumulate) + bias.
        logits = jnp.dot(h.astype(w2_ref.dtype), w2_ref[...],
                         preferred_element_type=jnp.float32) + b2_ref[...]
        # LogSoftmax along dim=1 (lane axis).  Padded classes carry a -1e30
        # bias, so exp(shifted) underflows to 0 and they drop out of the sum.
        m = jnp.max(logits, axis=-1, keepdims=True)
        shifted = logits - m
        lse = jnp.log(jnp.sum(jnp.exp(shifted), axis=-1, keepdims=True))
        o_ref[...] = (shifted - lse).astype(o_ref.dtype)


def prepare_params(w1, b1, w2, b2):
    """Pad + cast the weights once (hoisted out of the per-call path).

    Returns bf16 weight matrices / f32 biases padded to lane multiples of 128.
    Padded output classes get a -1e30 bias so they never affect the softmax.
    """
    cin, hid = w1.shape
    cout = w2.shape[1]
    cin_p = _round_up(cin, 128)
    hid_p = _round_up(hid, 128)
    cout_p = _round_up(cout, 128)

    w1_p = jnp.zeros((cin_p, hid_p), jnp.bfloat16).at[:cin, :hid].set(
        w1.astype(jnp.bfloat16))
    b1_p = jnp.zeros((1, hid_p), jnp.float32).at[:, :hid].set(
        jnp.reshape(b1, (1, hid)).astype(jnp.float32))
    w2_p = jnp.zeros((hid_p, cout_p), jnp.bfloat16).at[:hid, :cout].set(
        w2.astype(jnp.bfloat16))
    b2_p = jnp.full((1, cout_p), -1e30, jnp.float32).at[:, :cout].set(
        jnp.reshape(b2, (1, cout)).astype(jnp.float32))
    return w1_p, b1_p, w2_p, b2_p


@functools.partial(
    jax.jit,
    static_argnames=("out_channels", "desired_tile_n", "tile_k_override"))
def mlp_forward(x, w1_p, b1_p, w2_p, b2_p, *, out_channels,
                desired_tile_n=1024, tile_k_override=None):
    n, cin = x.shape
    cin_p, hid_p = w1_p.shape
    cout_p = w2_p.shape[1]
    assert cin <= cin_p and out_channels <= cout_p

    vmem_cap = _vmem_capacity_bytes()

    # --- K (Cin) tiling: keep w1 fully resident when it is cheap; otherwise
    # stream (tile_k, hid_p) slabs and accumulate the hidden layer in VMEM.
    if tile_k_override is not None:
        tile_k = int(tile_k_override)
        assert cin_p % tile_k == 0 and tile_k % 128 == 0
    elif cin_p * hid_p * 2 <= vmem_cap // 4:
        tile_k = cin_p
    else:
        tile_k = next(c for c in (1024, 512, 256, 128) if cin_p % c == 0)
    num_k = cin_p // tile_k

    # --- N (row) tiling: 16-row multiples (bf16 packs 16 sublanes/vreg),
    # sized to minimize row padding, with >= 2 grid steps when rows allow
    # (v7x has 2 TensorCores sharing the "parallel" axis).
    num_n = max(1, _cdiv(n, desired_tile_n))
    if num_n == 1 and n >= 64:
        num_n = 2
    tile_n = _round_up(_cdiv(max(n, 1), num_n), 16)

    # Per-step VMEM footprint (resident operands single-buffered).
    def footprint(tn):
        return (2 * tn * tile_k * 2                              # x (x2 bufs, bf16)
                + (2 if num_k > 1 else 1) * tile_k * hid_p * 2   # w1 slab(s)
                + hid_p * cout_p * 2                             # w2 (1 buf)
                + (hid_p + cout_p) * 4                           # biases
                + 2 * tn * cout_p * 4                            # out (x2 bufs)
                + tn * hid_p * 4                                 # h accumulator
                + 2 * tn * cout_p * 4)                           # epilogue temps

    # Shrink tile_n if the footprint would blow the (generation-aware) budget.
    while tile_n > 16 and footprint(tile_n) > int(0.7 * vmem_cap):
        tile_n = max(16, _round_up(tile_n // 2, 16))

    n_p = _round_up(max(n, 1), tile_n)
    num_n = n_p // tile_n
    grid = (num_n, num_k)

    # Only x is padded / cast per call (weights were prepared once).
    x_p = jnp.zeros((n_p, cin_p), jnp.bfloat16).at[:n, :cin].set(
        x.astype(jnp.bfloat16))

    # Single-buffer operands whose index_map is constant; w1 is only
    # double-buffered when it is actually streamed over the K axis.
    resident = pl.Buffered(1)
    w1_mode = pl.Buffered(1) if num_k == 1 else pl.Buffered(2)

    # Advisory cost estimate for the XLA scheduler.
    flops = 2 * n_p * (cin_p * hid_p + hid_p * cout_p)
    transcendentals = n_p * (cout_p + 1)
    bytes_accessed = (x_p.size * 2 + w1_p.size * 2 + w2_p.size * 2
                      + (b1_p.size + b2_p.size) * 4 + n_p * cout_p * 4)

    vmem_limit = int(min(int(0.85 * vmem_cap),
                         max(2 * footprint(tile_n), 32 * 1024 * 1024)))

    out_p = pl.pallas_call(
        mlp_kernel,
        out_shape=jax.ShapeDtypeStruct((n_p, cout_p), jnp.float32),
        grid=grid,
        in_specs=[
            pl.BlockSpec((tile_n, tile_k), lambda i, k: (i, k)),     # x
            pl.BlockSpec((tile_k, hid_p), lambda i, k: (k, 0),
                         pipeline_mode=w1_mode),                     # w1
            pl.BlockSpec((1, hid_p), lambda i, k: (0, 0),
                         pipeline_mode=resident),                    # b1
            pl.BlockSpec((hid_p, cout_p), lambda i, k: (0, 0),
                         pipeline_mode=resident),                    # w2
            pl.BlockSpec((1, cout_p), lambda i, k: (0, 0),
                         pipeline_mode=resident),                    # b2
        ],
        out_specs=pl.BlockSpec((tile_n, cout_p), lambda i, k: (i, 0)),
        scratch_shapes=[pltpu.VMEM((tile_n, hid_p), jnp.float32)],
        compiler_params=pltpu.CompilerParams(
            dimension_semantics=("parallel", "arbitrary"),
            vmem_limit_bytes=vmem_limit,
        ),
        cost_estimate=pl.CostEstimate(
            flops=flops,
            transcendentals=transcendentals,
            bytes_accessed=bytes_accessed,
        ),
    )(x_p, w1_p, b1_p, w2_p, b2_p)

    # Strip row / class padding. (Consumers that tolerate the padded,
    # lane-dense layout should take out_p directly and skip this HBM copy.)
    return out_p[:n, :out_channels]


def init_params(key, in_channels, hidden_channels, out_channels):
    # Deterministic init mimicking torch.nn.Linear (uniform +-1/sqrt(fan_in)).
    k1, k2, k3, k4 = jax.random.split(key, 4)
    lim1 = 1.0 / jnp.sqrt(in_channels)
    lim2 = 1.0 / jnp.sqrt(hidden_channels)
    w1 = jax.random.uniform(k1, (in_channels, hidden_channels), jnp.float32, -lim1, lim1)
    b1 = jax.random.uniform(k2, (1, hidden_channels), jnp.float32, -lim1, lim1)
    w2 = jax.random.uniform(k3, (hidden_channels, out_channels), jnp.float32, -lim2, lim2)
    b2 = jax.random.uniform(k4, (1, out_channels), jnp.float32, -lim2, lim2)
    return w1, b1, w2, b2


def mlp_reference_bf16(x, w1, b1, w2, b2):
    # Same bf16-operand / f32-accumulate recipe as the kernel (eval dropout = id).
    h = jnp.maximum(
        jnp.dot(x.astype(jnp.bfloat16), w1.astype(jnp.bfloat16),
                preferred_element_type=jnp.float32) + b1, 0.0)
    logits = jnp.dot(h.astype(jnp.bfloat16), w2.astype(jnp.bfloat16),
                     preferred_element_type=jnp.float32) + b2
    return jax.nn.log_softmax(logits, axis=1)


def mlp_reference_f32(x, w1, b1, w2, b2):
    h = jnp.maximum(x @ w1 + b1, 0.0)
    return jax.nn.log_softmax(h @ w2 + b2, axis=1)


def _check(out, x, w1, b1, w2, b2):
    ref_bf = mlp_reference_bf16(x, w1, b1, w2, b2)
    ref_f32 = mlp_reference_f32(x, w1, b1, w2, b2)
    assert out.shape == ref_f32.shape
    err_bf = jnp.max(jnp.abs(out - ref_bf))
    assert jnp.allclose(out, ref_bf, atol=2e-3, rtol=2e-3), f"bf16-recipe err={err_bf}"
    assert jnp.allclose(out, ref_f32, atol=5e-2, rtol=5e-2), "f32 sanity check failed"


if __name__ == "__main__":
    key = jax.random.PRNGKey(0)

    # --- Test 1: shapes consistent with the module (N nodes x in_channels).
    kx, kp, key = jax.random.split(key, 3)
    N, IN_C, HID_C, OUT_C = 8, 16, 32, 8
    x = jax.random.normal(kx, (N, IN_C), jnp.float32)
    w1, b1, w2, b2 = init_params(kp, IN_C, HID_C, OUT_C)
    params_p = prepare_params(w1, b1, w2, b2)
    out = jax.block_until_ready(mlp_forward(x, *params_p, out_channels=OUT_C))
    assert out.shape == (N, OUT_C)
    _check(out, x, w1, b1, w2, b2)

    # --- Test 2: multi N-tile grid (exercises the "parallel" axis / padding).
    kx, kp, key = jax.random.split(key, 3)
    N2, IN2, HID2, OUT2 = 200, 64, 96, 10
    x2 = jax.random.normal(kx, (N2, IN2), jnp.float32)
    p2 = init_params(kp, IN2, HID2, OUT2)
    pp2 = prepare_params(*p2)
    out2 = jax.block_until_ready(
        mlp_forward(x2, *pp2, out_channels=OUT2, desired_tile_n=128))
    _check(out2, x2, *p2)

    # --- Test 3: K-tiled (Cin reduction) path with the VMEM accumulator.
    kx, kp, key = jax.random.split(key, 3)
    N3, IN3, HID3, OUT3 = 40, 200, 64, 12
    x3 = jax.random.normal(kx, (N3, IN3), jnp.float32)
    p3 = init_params(kp, IN3, HID3, OUT3)
    pp3 = prepare_params(*p3)
    out3 = jax.block_until_ready(
        mlp_forward(x3, *pp3, out_channels=OUT3, tile_k_override=128))
    _check(out3, x3, *p3)

    print("KERNEL_OK")
</pallas_src>

<mosaic_0001>
module attributes {stable_mosaic.version = 11 : i64} {
  func.func @mlp_kernel(%arg0: i32, %arg1: i32, %arg2: memref<16x128xbf16, #tpu.memory_space<vmem>>, %arg3: memref<128x128xbf16, #tpu.memory_space<vmem>>, %arg4: memref<1x128xf32, #tpu.memory_space<vmem>>, %arg5: memref<128x128xbf16, #tpu.memory_space<vmem>>, %arg6: memref<1x128xf32, #tpu.memory_space<vmem>>, %arg7: memref<16x128xf32, #tpu.memory_space<vmem>>, %arg8: memref<16x128xf32, #tpu.memory_space<vmem>>) attributes {dimension_semantics = [#tpu.dimension_semantics<parallel>, #tpu.dimension_semantics<arbitrary>], iteration_bounds = array<i64: 1, 1>, scalar_prefetch = 0 : i64, scratch_operands = 1 : i64, tpu.core_type = #tpu.core_type<tc>, window_params = [{transform_indices = @transform_0, window_bounds = array<i64: 16, 128>}, {pipeline_mode = #tpu.pipeline_mode<synchronous>, transform_indices = @transform_1, window_bounds = array<i64: 128, 128>}, {pipeline_mode = #tpu.pipeline_mode<synchronous>, transform_indices = @transform_2, window_bounds = array<i64: 1, 128>}, {pipeline_mode = #tpu.pipeline_mode<synchronous>, transform_indices = @transform_3, window_bounds = array<i64: 128, 128>}, {pipeline_mode = #tpu.pipeline_mode<synchronous>, transform_indices = @transform_4, window_bounds = array<i64: 1, 128>}, {transform_indices = @transform_5, window_bounds = array<i64: 16, 128>}]} {
    %c0_i32 = arith.constant 0 : i32
    %0 = arith.cmpi eq, %arg1, %c0_i32 : i32
    %1 = arith.extui %0 : i1 to i32
    %c0_i32_0 = arith.constant 0 : i32
    %2 = arith.cmpi ne, %1, %c0_i32_0 : i32
    scf.if %2 {
      %cst_10 = arith.constant 0.000000e+00 : f32
      %12 = vector.broadcast %cst_10 : f32 to vector<16x128xf32>
      %c0_11 = arith.constant 0 : index
      %c0_12 = arith.constant 0 : index
      %13 = vector.load %arg8[%c0_11, %c0_12] : memref<16x128xf32, #tpu.memory_space<vmem>>, vector<16x128xf32>
      tpu.vector_store %arg8[%c0_11, %c0_12], %12 {strides = array<i32>} : memref<16x128xf32, #tpu.memory_space<vmem>>, vector<16x128xf32>,
    } else {
    }
    %c0 = arith.constant 0 : index
    %c0_1 = arith.constant 0 : index
    %3 = vector.load %arg8[%c0, %c0_1] : memref<16x128xf32, #tpu.memory_space<vmem>>, vector<16x128xf32>
    %c0_2 = arith.constant 0 : index
    %c0_3 = arith.constant 0 : index
    %4 = vector.load %arg2[%c0_2, %c0_3] : memref<16x128xbf16, #tpu.memory_space<vmem>>, vector<16x128xbf16>
    %c0_4 = arith.constant 0 : index
    %c0_5 = arith.constant 0 : index
    %5 = vector.load %arg3[%c0_4, %c0_5] : memref<128x128xbf16, #tpu.memory_space<vmem>>, vector<128x128xbf16>
    %cst = arith.constant dense<0.000000e+00> : vector<16x128xf32>
    %6 = tpu.matmul %4, %5, %cst {dimension_numbers = #tpu.dot_dimension_numbers<[1], [0], [0], [1], [0, 0, 1, 1], [], []>} : vector<16x128xbf16>, vector<128x128xbf16>, vector<16x128xf32> -> vector<16x128xf32>
    %7 = arith.addf %3, %6 : vector<16x128xf32>
    %c0_6 = arith.constant 0 : index
    %c0_7 = arith.constant 0 : index
    %8 = vector.load %arg8[%c0_6, %c0_7] : memref<16x128xf32, #tpu.memory_space<vmem>>, vector<16x128xf32>
    tpu.vector_store %arg8[%c0_6, %c0_7], %7 {strides = array<i32>} : memref<16x128xf32, #tpu.memory_space<vmem>>, vector<16x128xf32>,
    %c0_i32_8 = arith.constant 0 : i32
    %9 = arith.cmpi eq, %arg1, %c0_i32_8 : i32
    %10 = arith.extui %9 : i1 to i32
    %c0_i32_9 = arith.constant 0 : i32
    %11 = arith.cmpi ne, %10, %c0_i32_9 : i32
    scf.if %11 {
      %c0_10 = arith.constant 0 : index
      %c0_11 = arith.constant 0 : index
      %12 = vector.load %arg8[%c0_10, %c0_11] : memref<16x128xf32, #tpu.memory_space<vmem>>, vector<16x128xf32>
      %c0_12 = arith.constant 0 : index
      %c0_13 = arith.constant 0 : index
      %13 = vector.load %arg4[%c0_12, %c0_13] : memref<1x128xf32, #tpu.memory_space<vmem>>, vector<1x128xf32>
      %14 = vector.broadcast %13 : vector<1x128xf32> to vector<16x128xf32>
      %15 = arith.addf %12, %14 : vector<16x128xf32>
      %cst_14 = arith.constant 0.000000e+00 : f32
      %16 = vector.broadcast %cst_14 : f32 to vector<16x128xf32>
      %17 = arith.maximumf %15, %16 : vector<16x128xf32>
      %18 = arith.truncf %17 : vector<16x128xf32> to vector<16x128xbf16>
      %c0_15 = arith.constant 0 : index
      %c0_16 = arith.constant 0 : index
      %19 = vector.load %arg5[%c0_15, %c0_16] : memref<128x128xbf16, #tpu.memory_space<vmem>>, vector<128x128xbf16>
      %cst_17 = arith.constant dense<0.000000e+00> : vector<16x128xf32>
      %20 = tpu.matmul %18, %19, %cst_17 {dimension_numbers = #tpu.dot_dimension_numbers<[1], [0], [0], [1], [0, 0, 1, 1], [], []>} : vector<16x128xbf16>, vector<128x128xbf16>, vector<16x128xf32> -> vector<16x128xf32>
      %c0_18 = arith.constant 0 : index
      %c0_19 = arith.constant 0 : index
      %21 = vector.load %arg6[%c0_18, %c0_19] : memref<1x128xf32, #tpu.memory_space<vmem>>, vector<1x128xf32>
      %22 = vector.broadcast %21 : vector<1x128xf32> to vector<16x128xf32>
      %23 = arith.addf %20, %22 : vector<16x128xf32>
      %cst_20 = arith.constant dense<0xFF800000> : vector<16xf32>
      %24 = vector.multi_reduction <maximumf>, %23, %cst_20 [1] : vector<16x128xf32> to vector<16xf32>
      %25 = vector.shape_cast %24 : vector<16xf32> to vector<16x1xf32>
      %26 = vector.broadcast %25 : vector<16x1xf32> to vector<16x128xf32>
      %27 = arith.subf %23, %26 : vector<16x128xf32>
      %28 = math.exp %27 : vector<16x128xf32>
      %cst_21 = arith.constant dense<0.000000e+00> : vector<16xf32>
      %29 = vector.multi_reduction <add>, %28, %cst_21 [1] : vector<16x128xf32> to vector<16xf32>
      %30 = vector.shape_cast %29 : vector<16xf32> to vector<16x1xf32>
      %31 = math.log %30 : vector<16x1xf32>
      %32 = vector.broadcast %31 : vector<16x1xf32> to vector<16x128xf32>
      %33 = arith.subf %27, %32 : vector<16x128xf32>
      %c0_22 = arith.constant 0 : index
      %c0_23 = arith.constant 0 : index
      %34 = vector.load %arg7[%c0_22, %c0_23] : memref<16x128xf32, #tpu.memory_space<vmem>>, vector<16x128xf32>
      tpu.vector_store %arg7[%c0_22, %c0_23], %33 {strides = array<i32>} : memref<16x128xf32, #tpu.memory_space<vmem>>, vector<16x128xf32>,
    } else {
    }
    return
  }
  func.func @transform_0(%arg0: i32, %arg1: i32) -> (i32, i32) {
    %c0_i32 = arith.constant 0 : i32
    return %arg0, %arg1 : i32, i32
  }
  func.func @transform_1(%arg0: i32, %arg1: i32) -> (i32, i32) {
    %c0_i32 = arith.constant 0 : i32
    %c0_i32_0 = arith.constant 0 : i32
    return %arg1, %c0_i32 : i32, i32
  }
  func.func @transform_2(%arg0: i32, %arg1: i32) -> (i32, i32) {
    %c0_i32 = arith.constant 0 : i32
    %c0_i32_0 = arith.constant 0 : i32
    %c0_i32_1 = arith.constant 0 : i32
    return %c0_i32, %c0_i32_0 : i32, i32
  }
  func.func @transform_3(%arg0: i32, %arg1: i32) -> (i32, i32) {
    %c0_i32 = arith.constant 0 : i32
    %c0_i32_0 = arith.constant 0 : i32
    %c0_i32_1 = arith.constant 0 : i32
    return %c0_i32, %c0_i32_0 : i32, i32
  }
  func.func @transform_4(%arg0: i32, %arg1: i32) -> (i32, i32) {
    %c0_i32 = arith.constant 0 : i32
    %c0_i32_0 = arith.constant 0 : i32
    %c0_i32_1 = arith.constant 0 : i32
    return %c0_i32, %c0_i32_0 : i32, i32
  }
  func.func @transform_5(%arg0: i32, %arg1: i32) -> (i32, i32) {
    %c0_i32 = arith.constant 0 : i32
    %c0_i32_0 = arith.constant 0 : i32
    return %arg0, %c0_i32 : i32, i32
  }
}

</mosaic_0001>

<llo_original>
// kernel: mlp_forward.1
$region0: #{mlp_forward.1}
  #allocation0 [shape = 'u32[]', space=smem, size = 0x4, offset = 0x4, fixed_abs, tag = 'smem constant byte address 0x4 - core index']
  #allocation1 [shape = 'u32[144,128]{1,0:T(1,128)}', space=vmem, size = 0x12000, scoped, tag = 'internal scratch']
  #allocation2 [shape = 'f32[16,128]{1,0:T(8,128)}', space=vmem, size = 0x2000, scoped, tag = 'scratch operand']
  %s0 = inlined_call_operand.vmem [shape: bf16[16,128], index: 0, kind: input, shape index: {}]
  %s1 = inlined_call_operand.hbm [shape: bf16[128,128], index: 1, kind: input, shape index: {}]
  %s2 = inlined_call_operand.vmem [shape: f32[1,128], index: 2, kind: input, shape index: {}]
  %s3 = inlined_call_operand.hbm [shape: bf16[128,128], index: 3, kind: input, shape index: {}]
  %s4 = inlined_call_operand.vmem [shape: f32[1,128], index: 4, kind: input, shape index: {}]
  %s5 = inlined_call_operand.vmem [shape: f32[16,128], index: 5, kind: output, shape index: {}]
  %s6 = sld [smem:[#allocation0]]
  $region46: #{mlp_forward.1} parent=0
    _
  %s8 = ssub.s32 1, %s6
  %s9 = scalar_select 0, %s8, %s6
  $region1: #{mlp_forward.1} parent=0
    #allocation3 [shape = 'u8[32768]{0}', space=vmem, size = 0x8000, scoped, tag = 'input window, operand 1, single buffered']
    #allocation4 [shape = 's32[1]{0}', space=sflag, size = 0x4, scoped, tag = 'scoped memory for mlp_forward.1']
    #allocation5 [shape = 'u8[32768]{0}', space=vmem, size = 0x8000, scoped, tag = 'input window, operand 3, single buffered']
    #allocation6 [shape = 's32[1]{0}', space=sflag, size = 0x4, scoped, tag = 'scoped memory for mlp_forward.1']
    %10 = vsyncpa [#allocation4], 0
    %11 = vsyncpa [#allocation6], 0
    // Predicated region
    $region2: #{mlp_forward.1} parent=1 // pred_check
      _
    $region3: #{mlp_forward.1} parent=1 // pred_check_branch
      %13 = sbr.rel (0) target = $region5
    $region4: #{mlp_forward.1} parent=1 // pred_region
      _
    $region5: #{mlp_forward.1} parent=1 // pred_fallthru
      _
    // Predicated region
    $region6: #{mlp_forward.1} parent=1 // pred_check
      _
    $region7: #{mlp_forward.1} parent=1 // pred_check_branch
      %15 = sbr.rel (0) target = $region9
    $region8: #{mlp_forward.1} parent=1 // pred_region
      %s17 = ssub.s32 1024, 1024
      %18 = vsyncadd [#allocation4], %s17
      %s19 = sshll.u32 [#allocation3], 4
      %s20 = int_to_ptr.vmem [resolvable:$true] %s19
      %25 = dma.hbm_to_vmem [thread:$0]  %s1, 1024, %s20, [#allocation4], 64, 64, 4
    $region9: #{mlp_forward.1} parent=1 // pred_fallthru
      _
    // Predicated region
    $region10: #{mlp_forward.1} parent=1 // pred_check
      _
    $region11: #{mlp_forward.1} parent=1 // pred_check_branch
      %27 = sbr.rel (0) target = $region13
    $region12: #{mlp_forward.1} parent=1 // pred_region
      _
    $region13: #{mlp_forward.1} parent=1 // pred_fallthru
      _
    // Predicated region
    $region14: #{mlp_forward.1} parent=1 // pred_check
      _
    $region15: #{mlp_forward.1} parent=1 // pred_check_branch
      %29 = sbr.rel (0) target = $region17
    $region16: #{mlp_forward.1} parent=1 // pred_region
      %s31 = ssub.s32 1024, 1024
      %32 = vsyncadd [#allocation6], %s31
      %s33 = sshll.u32 [#allocation5], 4
      %s34 = int_to_ptr.vmem [resolvable:$true] %s33
      %39 = dma.hbm_to_vmem [thread:$0]  %s3, 1024, %s34, [#allocation6], 64, 64, 4
    $region17: #{mlp_forward.1} parent=1 // pred_fallthru
      _
    // Predicated region
    $region18: #{mlp_forward.1} parent=1 // pred_check
      _
    $region19: #{mlp_forward.1} parent=1 // pred_check_branch
      %41 = sbr.rel (0) target = $region21
    $region20: #{mlp_forward.1} parent=1 // pred_region
      _
    $region21: #{mlp_forward.1} parent=1 // pred_fallthru
      _
    // Predicated region
    $region22: #{mlp_forward.1} parent=1 // pred_check
      _
    $region23: #{mlp_forward.1} parent=1 // pred_check_branch
      %43 = sbr.rel (0) target = $region25
    $region24: #{mlp_forward.1} parent=1 // pred_region
      %44 = dma.done [#allocation4], 1024
    $region25: #{mlp_forward.1} parent=1 // pred_fallthru
      _
    // Predicated region
    $region26: #{mlp_forward.1} parent=1 // pred_check
      _
    $region27: #{mlp_forward.1} parent=1 // pred_check_branch
      %46 = sbr.rel (0) target = $region29
    $region28: #{mlp_forward.1} parent=1 // pred_region
      %47 = dma.done [#allocation6], 1024
    $region29: #{mlp_forward.1} parent=1 // pred_fallthru
      _
    %p49 = scmp.eq.s32.totalorder 0, 0
    // Predicated region
    $region30: #{mlp_forward.1} parent=1 // pred_check
      %p50 = pneg %p49
    $region31: #{mlp_forward.1} parent=1 // pred_check_branch
      %52 = sbr.rel (%p50) target = $region33
    $region32: #{mlp_forward.1} parent=1 // pred_region
      %53 = vst [vmem:[#allocation2] sm:$0xff] 0.0
      %54 = vst [vmem:[#allocation2 + $0x8] sm:$0xff] 0.0
    $region33: #{mlp_forward.1} parent=1 // pred_fallthru
      _
    %v55 = vld [vmem:[#allocation2] sm:$0xff]
    %v56 = vld [vmem:[#allocation2 + $0x8] sm:$0xff]
    %v57 = vld [vmem:[%s0] sm:$0xf]
    %v58 = vld [vmem:[%s0 + $0x4] sm:$0xf]
    %v59 = vld [vmem:[#allocation3] sm:$0xf]
    %v60 = vld [vmem:[#allocation3 + $0x4] sm:$0xf]
    %v61 = vld [vmem:[#allocation3 + $0x8] sm:$0xf]
    %v62 = vld [vmem:[#allocation3 + $0xc] sm:$0xf]
    %v63 = vld [vmem:[#allocation3 + $0x10] sm:$0xf]
    %v64 = vld [vmem:[#allocation3 + $0x14] sm:$0xf]
    %v65 = vld [vmem:[#allocation3 + $0x18] sm:$0xf]
    %v66 = vld [vmem:[#allocation3 + $0x1c] sm:$0xf]
    %v67 = vld [vmem:[#allocation3 + $0x20] sm:$0xf]
    %v68 = vld [vmem:[#allocation3 + $0x24] sm:$0xf]
    %v69 = vld [vmem:[#allocation3 + $0x28] sm:$0xf]
    %v70 = vld [vmem:[#allocation3 + $0x2c] sm:$0xf]
    %v71 = vld [vmem:[#allocation3 + $0x30] sm:$0xf]
    %v72 = vld [vmem:[#allocation3 + $0x34] sm:$0xf]
    %v73 = vld [vmem:[#allocation3 + $0x38] sm:$0xf]
    %v74 = vld [vmem:[#allocation3 + $0x3c] sm:$0xf]
    %v77 = vunpack.c.l.b16 %v57
    %v78 = vunpack.c.l.b16 %v58
    %v79 = vpack.c.b16 %v78, %v77
    %v97 = vunpack.c.l.b16 %v59
    %v98 = vunpack.c.l.b16 %v60
    %v99 = vunpack.c.l.b16 %v61
    %v100 = vunpack.c.l.b16 %v62
    %v101 = vunpack.c.l.b16 %v63
    %v102 = vunpack.c.l.b16 %v64
    %v103 = vunpack.c.l.b16 %v65
    %v104 = vunpack.c.l.b16 %v66
    %v105 = vunpack.c.l.b16 %v67
    %v106 = vunpack.c.l.b16 %v68
    %v107 = vunpack.c.l.b16 %v69
    %v108 = vunpack.c.l.b16 %v70
    %v109 = vunpack.c.l.b16 %v71
    %v110 = vunpack.c.l.b16 %v72
    %v111 = vunpack.c.l.b16 %v73
    %v112 = vunpack.c.l.b16 %v74
    %v113 = vpack.c.b16 %v98, %v97
    %v114 = vpack.c.b16 %v100, %v99
    %v115 = vpack.c.b16 %v102, %v101
    %v116 = vpack.c.b16 %v104, %v103
    %v117 = vpack.c.b16 %v106, %v105
    %v118 = vpack.c.b16 %v108, %v107
    %v119 = vpack.c.b16 %v110, %v109
    %v120 = vpack.c.b16 %v112, %v111
    %129 = vmatprep.subr.bf16.mxu0 0
    %130 = vmatpush1.bf16.msra.mxu0 %v113
    %131 = vmatprep.subr.bf16.mxu0 0
    %132 = vmatpush1.bf16.msra.mxu0 %v114
    %133 = vmatprep.subr.bf16.mxu0 0
    %134 = vmatpush1.bf16.msra.mxu0 %v115
    %135 = vmatprep.subr.bf16.mxu0 0
    %136 = vmatpush1.bf16.msra.mxu0 %v116
    %137 = vmatprep.subr.bf16.mxu0 0
    %138 = vmatpush1.bf16.msra.mxu0 %v117
    %139 = vmatprep.subr.bf16.mxu0 0
    %140 = vmatpush1.bf16.msra.mxu0 %v118
    %141 = vmatprep.subr.bf16.mxu0 0
    %142 = vmatpush1.bf16.msra.mxu0 %v119
    %143 = vmatprep.subr.bf16.mxu0 0
    %144 = vmatpush1.bf16.msra.mxu0 %v120
    %145 = vmatprep.subr.bf16.mxu0 0
    %146 = vmatpush1.bf16.msra.mxu0 0
    %147 = vmatprep.subr.bf16.mxu0 0
    %148 = vmatpush1.bf16.msra.mxu0 0
    %149 = vmatprep.subr.bf16.mxu0 0
    %150 = vmatpush1.bf16.msra.mxu0 0
    %151 = vmatprep.subr.bf16.mxu0 0
    %152 = vmatpush1.bf16.msra.mxu0 0
    %153 = vmatprep.subr.bf16.mxu0 0
    %154 = vmatpush1.bf16.msra.mxu0 0
    %155 = vmatprep.subr.bf16.mxu0 0
    %156 = vmatpush1.bf16.msra.mxu0 0
    %157 = vmatprep.subr.bf16.mxu0 0
    %158 = vmatpush1.bf16.msra.mxu0 0
    %159 = vmatprep.subr.bf16.mxu0 0
    %160 = vmatpush1.bf16.msra.mxu0 0
    %161 = vmatprep.mubr.bf16.mxu0 0
    %162 = vmatmul.mubr.bf16.gmra.mrb[0].mxu0 %v79
    %v163 = vpop.f32.mrb[0].mxu0
    %v164 = vadd.f32 0.0, %v163
    %v165 = vpop.f32.mrb[0].mxu0
    %v166 = vpop.f32.mrb[0].mxu0
    %v167 = vadd.f32 0.0, %v166
    %v168 = vpop.f32.mrb[0].mxu0
    %169 = vdwg.mxu0
    %v170 = vadd.f32 %v55, %v164
    %v171 = vadd.f32 %v56, %v167
    %172 = vst [vmem:[#allocation2] sm:$0xff] %v170
    %173 = vst [vmem:[#allocation2 + $0x8] sm:$0xff] %v171
    // Predicated region
    $region34: #{mlp_forward.1} parent=1 // pred_check
      %p174 = pneg %p49
    $region35: #{mlp_forward.1} parent=1 // pred_check_branch
      %176 = sbr.rel (%p174) target = $region37
    $region36: #{mlp_forward.1} parent=1 // pred_region
      %v177 = vld [vmem:[#allocation2] sm:$0xff]
      %v178 = vld [vmem:[#allocation2 + $0x8] sm:$0xff]
      %v179 = vld [vmem:[%s2] sm:$0x1]
      %v181 = vlaneseq
      %v182 = vshrl.u32 %v181, 7
      %v183 = vsub.s32 0, %v182
      %v184 = vrot.slane %v179, %v183
      %v186 = vadd.f32 %v177, %v184
      %v187 = vadd.f32 %v178, %v184
      %v188 = vmax.f32 %v186, 0.0
      %v189 = vmax.f32 %v187, 0.0
      %v190 = vpack.c.bf16 %v189, %v188
      %v191 = vld [vmem:[#allocation5] sm:$0xf]
      %v192 = vld [vmem:[#allocation5 + $0x4] sm:$0xf]
      %v193 = vld [vmem:[#allocation5 + $0x8] sm:$0xf]
      %v194 = vld [vmem:[#allocation5 + $0xc] sm:$0xf]
      %v195 = vld [vmem:[#allocation5 + $0x10] sm:$0xf]
      %v196 = vld [vmem:[#allocation5 + $0x14] sm:$0xf]
      %v197 = vld [vmem:[#allocation5 + $0x18] sm:$0xf]
      %v198 = vld [vmem:[#allocation5 + $0x1c] sm:$0xf]
      %v199 = vld [vmem:[#allocation5 + $0x20] sm:$0xf]
      %v200 = vld [vmem:[#allocation5 + $0x24] sm:$0xf]
      %v201 = vld [vmem:[#allocation5 + $0x28] sm:$0xf]
      %v202 = vld [vmem:[#allocation5 + $0x2c] sm:$0xf]
      %v203 = vld [vmem:[#allocation5 + $0x30] sm:$0xf]
      %v204 = vld [vmem:[#allocation5 + $0x34] sm:$0xf]
      %v205 = vld [vmem:[#allocation5 + $0x38] sm:$0xf]
      %v206 = vld [vmem:[#allocation5 + $0x3c] sm:$0xf]
      %v207 = vld [vmem:[%s4] sm:$0x1]
      %v209 = vlaneseq
      %v210 = vshrl.u32 %v209, 7
      %v211 = vsub.s32 0, %v210
      %v212 = vrot.slane %v207, %v211
      %v230 = vunpack.c.l.b16 %v191
      %v231 = vunpack.c.l.b16 %v192
      %v232 = vunpack.c.l.b16 %v193
      %v233 = vunpack.c.l.b16 %v194
      %v234 = vunpack.c.l.b16 %v195
      %v235 = vunpack.c.l.b16 %v196
      %v236 = vunpack.c.l.b16 %v197
      %v237 = vunpack.c.l.b16 %v198
      %v238 = vunpack.c.l.b16 %v199
      %v239 = vunpack.c.l.b16 %v200
      %v240 = vunpack.c.l.b16 %v201
      %v241 = vunpack.c.l.b16 %v202
      %v242 = vunpack.c.l.b16 %v203
      %v243 = vunpack.c.l.b16 %v204
      %v244 = vunpack.c.l.b16 %v205
      %v245 = vunpack.c.l.b16 %v206
      %v246 = vpack.c.b16 %v231, %v230
      %v247 = vpack.c.b16 %v233, %v232
      %v248 = vpack.c.b16 %v235, %v234
      %v249 = vpack.c.b16 %v237, %v236
      %v250 = vpack.c.b16 %v239, %v238
      %v251 = vpack.c.b16 %v241, %v240
      %v252 = vpack.c.b16 %v243, %v242
      %v253 = vpack.c.b16 %v245, %v244
      %262 = vmatprep.subr.bf16.mxu0 0
      %263 = vmatpush1.bf16.msra.mxu0 %v246
      %264 = vmatprep.subr.bf16.mxu0 0
      %265 = vmatpush1.bf16.msra.mxu0 %v247
      %266 = vmatprep.subr.bf16.mxu0 0
      %267 = vmatpush1.bf16.msra.mxu0 %v248
      %268 = vmatprep.subr.bf16.mxu0 0
      %269 = vmatpush1.bf16.msra.mxu0 %v249
      %270 = vmatprep.subr.bf16.mxu0 0
      %271 = vmatpush1.bf16.msra.mxu0 %v250
      %272 = vmatprep.subr.bf16.mxu0 0
      %273 = vmatpush1.bf16.msra.mxu0 %v251
      %274 = vmatprep.subr.bf16.mxu0 0
      %275 = vmatpush1.bf16.msra.mxu0 %v252
      %276 = vmatprep.subr.bf16.mxu0 0
      %277 = vmatpush1.bf16.msra.mxu0 %v253
      %278 = vmatprep.subr.bf16.mxu0 0
      %279 = vmatpush1.bf16.msra.mxu0 0
      %280 = vmatprep.subr.bf16.mxu0 0
      %281 = vmatpush1.bf16.msra.mxu0 0
      %282 = vmatprep.subr.bf16.mxu0 0
      %283 = vmatpush1.bf16.msra.mxu0 0
      %284 = vmatprep.subr.bf16.mxu0 0
      %285 = vmatpush1.bf16.msra.mxu0 0
      %286 = vmatprep.subr.bf16.mxu0 0
      %287 = vmatpush1.bf16.msra.mxu0 0
      %288 = vmatprep.subr.bf16.mxu0 0
      %289 = vmatpush1.bf16.msra.mxu0 0
      %290 = vmatprep.subr.bf16.mxu0 0
      %291 = vmatpush1.bf16.msra.mxu0 0
      %292 = vmatprep.subr.bf16.mxu0 0
      %293 = vmatpush1.bf16.msra.mxu0 0
      %294 = vmatprep.mubr.bf16.mxu0 0
      %295 = vmatmul.mubr.bf16.gmra.mrb[0].mxu0 %v190
      %v296 = vpop.f32.mrb[0].mxu0
      %v297 = vadd.f32 %v212, %v296
      %v298 = vpop.f32.mrb[0].mxu0
      %v299 = vpop.f32.mrb[0].mxu0
      %v300 = vadd.f32 %v212, %v299
      %v301 = vpop.f32.mrb[0].mxu0
      %302 = vdwg.mxu0
      %303 = vmax.xlane.f32.xlu0 %v297
      %v304 = vpop.xlane.xlu0 %303
      %305 = vmax.xlane.f32.xlu0 %v300
      %v306 = vpop.xlane.xlu0 %305
      %v307 = vsub.f32 %v297, %v304
      %v308 = vsub.f32 %v300, %v306
      %v309 = vmul.f32 %v307, 1.442695
      %v310 = vpow.pop %v309
      %v311 = vmul.f32 %v308, 1.442695
      %v312 = vpow.pop %v311
      %313 = vadd.xlane.f32.xlu0 %v310
      %v314 = vpop.xlane.xlu0 %313
      %315 = vadd.xlane.f32.xlu0 %v312
      %v316 = vpop.xlane.xlu0 %315
      %v317 = vlog2.pop %v314
      %v318 = vmul.f32 %v317, 0.6931472
      %v319 = vlog2.pop %v316
      %v320 = vmul.f32 %v319, 0.6931472
      %v321 = vsub.f32 %v307, %v318
      %v322 = vsub.f32 %v308, %v320
      %323 = vst [vmem:[%s5] sm:$0xff] %v321
      %324 = vst [vmem:[%s5 + $0x8] sm:$0xff] %v322
    $region37: #{mlp_forward.1} parent=1 // pred_fallthru
      _
    // Predicated region
    $region38: #{mlp_forward.1} parent=1 // pred_check
      _
    $region39: #{mlp_forward.1} parent=1 // pred_check_branch
      %326 = sbr.rel (0) target = $region41
    $region40: #{mlp_forward.1} parent=1 // pred_region
      _
    $region41: #{mlp_forward.1} parent=1 // pred_fallthru
      _
    // Predicated region
    $region42: #{mlp_forward.1} parent=1 // pred_check
      _
    $region43: #{mlp_forward.1} parent=1 // pred_check_branch
      %328 = sbr.rel (0) target = $region45
    $region44: #{mlp_forward.1} parent=1 // pred_region
      _
    $region45: #{mlp_forward.1} parent=1 // pred_fallthru
      _
    %329 = vsyncpa [#allocation4], 1
    %330 = vsyncpa [#allocation6], 1

</llo_original>
